<compile_context>
chip_gen: v5e
topology: v5e:2x2
jax: 0.10.0
libtpu: 0.0.40
codegen_flags: <defaults>
</compile_context>

<pallas_src>
import functools

import numpy as np

import jax
import jax.numpy as jnp
from jax.experimental import pallas as pl
from jax.experimental.pallas import tpu as pltpu

ACT_BITS = 8
WEIGHT_BITS = 8


# ---------------------------------------------------------------------------
# fake-quant helpers (used both inside the kernel and in the reference)
# ---------------------------------------------------------------------------
def _fq_signed(x, scale, bits=ACT_BITS):
    qmax = 2.0 ** (bits - 1) - 1.0
    qmin = -(2.0 ** (bits - 1))
    return jnp.clip(jnp.round(x / scale), qmin, qmax) * scale


def _fq_unsigned(x, scale, bits=ACT_BITS):
    qmax = 2.0 ** bits - 1.0
    return jnp.clip(jnp.round(x / scale), 0.0, qmax) * scale


def _fq_weight(w, bits=WEIGHT_BITS):
    qmax = 2.0 ** (bits - 1) - 1.0
    s = jnp.maximum(jnp.max(jnp.abs(w)) / qmax, 1e-8)
    return jnp.clip(jnp.round(w / s), -qmax, qmax) * s


# ---------------------------------------------------------------------------
# generation-dependent batching of the grid
# ---------------------------------------------------------------------------
def _pick_batch_block(n):
    """Samples per grid step.  Fold the whole batch into one step on
    single-TensorCore chips (v5e / v6e) to avoid per-step grid overhead; keep
    one sample per parallel step elsewhere so multi-TensorCore chips (v7x)
    shard the batch across cores."""
    try:
        kind = jax.devices()[0].device_kind.lower()
    except Exception:
        return 1
    if any(tag in kind for tag in ("v5e", "v5 lite", "v5litepod", "v6e", "v6 lite")):
        return n
    return 1


def _build_tap_masks(H, W, K):
    """(K*K, 1, H*W) float 0/1 masks: 1 where the tap's 2-D neighbour lies
    inside the image (reproduces the conv's zero padding on the flattened
    lane axis: kills row-wrap and top/bottom halo contributions)."""
    p = (K - 1) // 2
    hh, ww = np.meshgrid(np.arange(H), np.arange(W), indexing="ij")
    masks = []
    for dh in range(-p, p + 1):
        for dw in range(-p, p + 1):
            ok = ((hh + dh >= 0) & (hh + dh < H) &
                  (ww + dw >= 0) & (ww + dw < W))
            masks.append(ok.reshape(-1))
    return np.stack(masks, 0).astype(np.float32)[:, None, :]


# ---------------------------------------------------------------------------
# Pallas kernel: B samples per grid step, lane-dense (C, H*W) layout.
#   quant_input -> depthwise KxK conv (conv1) -> QuantReLU
#   -> fused [conv2 | 1x1 shortcut] matmul -> requant_add_out
# ---------------------------------------------------------------------------
def pdc_kernel(x_ref, w1_ref, mask_ref, wstk_ref, out_ref, xz_ref, cat_ref, *,
               H, W, K, Cin, Cout, B, lpad, s_in, s_relu, s_out):
    HW = H * W
    p = (K - 1) // 2

    # quant_input: signed 8-bit fake-quant on the (unpadded) image only.
    xq = _fq_signed(x_ref[...], s_in)                       # (B, Cin, HW)

    # Stage xq into a lane-halo'd VMEM scratch so every depthwise tap becomes a
    # static lane-shifted window read (in-kernel halo handling, no jnp.pad).
    xz_ref[...] = jnp.zeros_like(xz_ref)
    xz_ref[:, :, lpad:lpad + HW] = xq

    # conv1: depthwise KxK as K*K shifted, masked multiply-accumulates (VPU).
    acc = jnp.zeros((B, Cin, HW), jnp.float32)
    t = 0
    for dh in range(-p, p + 1):
        for dw in range(-p, p + 1):
            if dh == 0 and dw == 0:
                v = xq                                      # center tap, no mask
            else:
                off = lpad + dh * W + dw
                v = xz_ref[:, :, off:off + HW] * mask_ref[t]
            acc = acc + w1_ref[t] * v                       # w1_ref[t]: (Cin, 1)
            t += 1

    # relu2: ReLU + unsigned 8-bit fake-quant
    y = _fq_unsigned(jnp.maximum(acc, 0.0), s_relu)

    # conv2 + shortcut fused into ONE 1x1 matmul on the MXU:
    #   [w2 | wsc] (Cout, 2*Cin)  @  [y ; xq] (2*Cin, HW)
    cat_ref[:, 0:Cin, :] = y
    cat_ref[:, Cin:2 * Cin, :] = xq
    wstk = wstk_ref[...]                                    # (Cout, 2*Cin)
    for b in range(B):                                      # tiny static loop
        o = jnp.dot(wstk, cat_ref[b], preferred_element_type=jnp.float32)
        # residual add lives inside the contraction; requant_add_out:
        out_ref[b] = _fq_signed(o, s_out).astype(out_ref.dtype)


# ---------------------------------------------------------------------------
# wrapper (NCHW in / NCHW out) -- only free reshapes around the pallas_call
# ---------------------------------------------------------------------------
@functools.partial(jax.jit,
                   static_argnames=("K", "s_in", "s_relu", "s_out", "batch_block"))
def quant_pdc_block(x_nchw, w1_dw, w2, wsc, *, K, s_in, s_relu, s_out,
                    batch_block=None):
    N, Cin, H, W = x_nchw.shape
    Cout = w2.shape[0]
    HW = H * W
    p = (K - 1) // 2

    if batch_block is None:
        batch_block = _pick_batch_block(N)
    if N % batch_block != 0:
        batch_block = 1
    grid_n = N // batch_block

    # Lane-dense NCHW: (N, C, H*W) -- free row-major reshape, no transpose/pad.
    x_flat = x_nchw.reshape(N, Cin, HW).astype(jnp.float32)
    # depthwise taps as (K*K, Cin, 1); 1x1 weights pre-stacked to (Cout, 2*Cin)
    w1_taps = w1_dw.astype(jnp.float32).reshape(K * K, Cin)[:, :, None]
    wstk = jnp.concatenate([w2, wsc], axis=1).astype(jnp.float32)
    masks = jnp.asarray(_build_tap_masks(H, W, K))

    # lane-aligned left halo for the in-kernel shifted-window reads
    halo = p * W + p
    lpad = ((halo + 127) // 128) * 128

    kernel = functools.partial(
        pdc_kernel, H=H, W=W, K=K, Cin=Cin, Cout=Cout, B=batch_block, lpad=lpad,
        s_in=s_in, s_relu=s_relu, s_out=s_out)

    out_flat = pl.pallas_call(
        kernel,
        out_shape=jax.ShapeDtypeStruct((N, Cout, HW), jnp.float32),
        grid_spec=pltpu.PrefetchScalarGridSpec(
            num_scalar_prefetch=0,
            grid=(grid_n,),
            in_specs=[
                pl.BlockSpec((batch_block, Cin, HW), lambda g: (g, 0, 0)),
                pl.BlockSpec((K * K, Cin, 1), lambda g: (0, 0, 0)),
                pl.BlockSpec((K * K, 1, HW), lambda g: (0, 0, 0)),
                pl.BlockSpec((Cout, 2 * Cin), lambda g: (0, 0)),
            ],
            out_specs=pl.BlockSpec((batch_block, Cout, HW),
                                   lambda g: (g, 0, 0)),
            scratch_shapes=[
                pltpu.VMEM((batch_block, Cin, HW + 2 * lpad), jnp.float32),
                pltpu.VMEM((batch_block, 2 * Cin, HW), jnp.float32),
            ],
        ),
        compiler_params=pltpu.CompilerParams(
            dimension_semantics=("parallel",)),
    )(x_flat, w1_taps, masks, wstk)

    return out_flat.reshape(N, Cout, H, W)


# ---------------------------------------------------------------------------
# pure-JAX reference (same quantization semantics) for a sanity check
# ---------------------------------------------------------------------------
def reference_forward(x_nchw, w1_dw, w2, wsc, *, K, s_in, s_relu, s_out):
    N, Cin, H, W = x_nchw.shape
    p = (K - 1) // 2
    x_nhwc = jnp.transpose(x_nchw, (0, 2, 3, 1)).astype(jnp.float32)
    xq = _fq_signed(x_nhwc, s_in)
    xp = jnp.pad(xq, ((0, 0), (p, p), (p, p), (0, 0)))
    acc = jnp.zeros((N, H, W, Cin), jnp.float32)
    for dh in range(K):
        for dw in range(K):
            acc = acc + xp[:, dh:dh + H, dw:dw + W, :] * w1_dw[dh, dw, :]
    y = _fq_unsigned(jnp.maximum(acc, 0.0), s_relu)
    y2 = jnp.einsum('nhwc,oc->nhwo', y, w2,
                    precision=jax.lax.Precision.HIGHEST)
    idn = jnp.einsum('nhwc,oc->nhwo', xq, wsc,
                     precision=jax.lax.Precision.HIGHEST)
    out = _fq_signed(y2 + idn, s_out)
    return jnp.transpose(out, (0, 3, 1, 2))


if __name__ == "__main__":
    key = jax.random.PRNGKey(0)
    k_x, k_w1, k_w2, k_sc = jax.random.split(key, 4)

    # configuration: pdc_type != 'rd' -> 3x3 depthwise conv1; stride=1;
    # inplane != ouplane -> shortcut is a 1x1 QuantConv2d.
    N, Cin, Cout, H, W = 2, 4, 8, 16, 16
    K = 3

    x = jax.random.normal(k_x, (N, Cin, H, W), dtype=jnp.float32)

    # deterministic weights, pre fake-quantized (brevitas QuantConv2d weights).
    # conv1 depthwise weight (PyTorch (Cin,1,K,K)) stored here as (K,K,Cin);
    # conv2 / shortcut 1x1 weights (PyTorch (Cout,Cin,1,1)) stored as (Cout,Cin).
    w1_dw = _fq_weight(0.2 * jax.random.normal(k_w1, (K, K, Cin), jnp.float32))
    w2 = _fq_weight(0.2 * jax.random.normal(k_w2, (Cout, Cin), jnp.float32))
    wsc = _fq_weight(0.2 * jax.random.normal(k_sc, (Cout, Cin), jnp.float32))

    # deterministic activation-quant scales (stand-ins for brevitas learned scales)
    s_in = 4.0 / 127.0     # quant_input  (signed 8-bit)
    s_relu = 4.0 / 255.0   # relu2        (unsigned 8-bit)
    s_out = 4.0 / 127.0    # requant_add_out (signed 8-bit)

    out = quant_pdc_block(x, w1_dw, w2, wsc, K=K,
                          s_in=s_in, s_relu=s_relu, s_out=s_out)
    out = jax.block_until_ready(out)

    ref = reference_forward(x, w1_dw, w2, wsc, K=K,
                            s_in=s_in, s_relu=s_relu, s_out=s_out)

    assert out.shape == (N, Cout, H, W), out.shape
    # allow at most one output quant-step of rounding disagreement
    max_err = float(jnp.max(jnp.abs(out - ref)))
    assert max_err <= s_out * 1.001 + 1e-6, f"max_err={max_err}"

    print("KERNEL_OK")
</pallas_src>

<mosaic_0001>
module attributes {stable_mosaic.version = 11 : i64} {
  func.func @pdc_kernel(%arg0: i32, %arg1: memref<1x4x256xf32, #tpu.memory_space<vmem>>, %arg2: memref<9x4x1xf32, #tpu.memory_space<vmem>>, %arg3: memref<9x1x256xf32, #tpu.memory_space<vmem>>, %arg4: memref<8x8xf32, #tpu.memory_space<vmem>>, %arg5: memref<1x8x256xf32, #tpu.memory_space<vmem>>, %arg6: memref<1x4x512xf32, #tpu.memory_space<vmem>>, %arg7: memref<1x8x256xf32, #tpu.memory_space<vmem>>) attributes {dimension_semantics = [#tpu.dimension_semantics<parallel>], iteration_bounds = array<i64: 2>, scalar_prefetch = 0 : i64, scratch_operands = 2 : i64, tpu.core_type = #tpu.core_type<tc>, window_params = [{transform_indices = @transform_0, window_bounds = array<i64: 1, 4, 256>}, {pipeline_mode = #tpu.pipeline_mode<synchronous>, transform_indices = @transform_1, window_bounds = array<i64: 9, 4, 1>}, {pipeline_mode = #tpu.pipeline_mode<synchronous>, transform_indices = @transform_2, window_bounds = array<i64: 9, 1, 256>}, {pipeline_mode = #tpu.pipeline_mode<synchronous>, transform_indices = @transform_3, window_bounds = array<i64: 8, 8>}, {transform_indices = @transform_4, window_bounds = array<i64: 1, 8, 256>}]} {
    %c0 = arith.constant 0 : index
    %c0_0 = arith.constant 0 : index
    %c0_1 = arith.constant 0 : index
    %0 = vector.load %arg1[%c0, %c0_0, %c0_1] : memref<1x4x256xf32, #tpu.memory_space<vmem>>, vector<1x4x256xf32>
    %cst = arith.constant 0.0314960629 : f32
    %1 = vector.broadcast %cst : f32 to vector<1x4x256xf32>
    %2 = arith.divf %0, %1 : vector<1x4x256xf32>
    %3 = math.roundeven %2 : vector<1x4x256xf32>
    %cst_2 = arith.constant -1.280000e+02 : f32
    %cst_3 = arith.constant 1.270000e+02 : f32
    %4 = vector.broadcast %cst_2 : f32 to vector<1x4x256xf32>
    %5 = arith.maximumf %4, %3 : vector<1x4x256xf32>
    %6 = vector.broadcast %cst_3 : f32 to vector<1x4x256xf32>
    %7 = arith.minimumf %6, %5 : vector<1x4x256xf32>
    %cst_4 = arith.constant 0.0314960629 : f32
    %8 = vector.broadcast %cst_4 : f32 to vector<1x4x256xf32>
    %9 = arith.mulf %7, %8 : vector<1x4x256xf32>
    %cst_5 = arith.constant 0.000000e+00 : f32
    %10 = vector.broadcast %cst_5 : f32 to vector<1x4x512xf32>
    %c0_6 = arith.constant 0 : index
    %c0_7 = arith.constant 0 : index
    %c0_8 = arith.constant 0 : index
    %11 = vector.load %arg6[%c0_6, %c0_7, %c0_8] : memref<1x4x512xf32, #tpu.memory_space<vmem>>, vector<1x4x512xf32>
    tpu.vector_store %arg6[%c0_6, %c0_7, %c0_8], %10 {strides = array<i32>} : memref<1x4x512xf32, #tpu.memory_space<vmem>>, vector<1x4x512xf32>,
    %c0_9 = arith.constant 0 : index
    %c0_10 = arith.constant 0 : index
    %c128 = arith.constant 128 : index
    %12 = vector.load %arg6[%c0_9, %c0_10, %c128] : memref<1x4x512xf32, #tpu.memory_space<vmem>>, vector<1x4x256xf32>
    tpu.vector_store %arg6[%c0_9, %c0_10, %c128], %9 {strides = array<i32>} : memref<1x4x512xf32, #tpu.memory_space<vmem>>, vector<1x4x256xf32>,
    %cst_11 = arith.constant 0.000000e+00 : f32
    %13 = vector.broadcast %cst_11 : f32 to vector<1x4x256xf32>
    %c0_12 = arith.constant 0 : index
    %c0_13 = arith.constant 0 : index
    %c111 = arith.constant 111 : index
    %14 = vector.load %arg6[%c0_12, %c0_13, %c111] : memref<1x4x512xf32, #tpu.memory_space<vmem>>, vector<1x4x256xf32>
    %c0_14 = arith.constant 0 : index
    %c0_15 = arith.constant 0 : index
    %c0_16 = arith.constant 0 : index
    %15 = vector.load %arg3[%c0_14, %c0_15, %c0_16] : memref<9x1x256xf32, #tpu.memory_space<vmem>>, vector<1x1x256xf32>
    %16 = vector.shape_cast %15 : vector<1x1x256xf32> to vector<1x256xf32>
    %17 = vector.shape_cast %16 : vector<1x256xf32> to vector<1x1x256xf32>
    %18 = vector.broadcast %17 : vector<1x1x256xf32> to vector<1x4x256xf32>
    %19 = arith.mulf %14, %18 : vector<1x4x256xf32>
    %c0_17 = arith.constant 0 : index
    %c0_18 = arith.constant 0 : index
    %c0_19 = arith.constant 0 : index
    %20 = vector.load %arg2[%c0_17, %c0_18, %c0_19] : memref<9x4x1xf32, #tpu.memory_space<vmem>>, vector<1x4x1xf32>
    %21 = vector.shape_cast %20 : vector<1x4x1xf32> to vector<4x1xf32>
    %22 = vector.shape_cast %21 : vector<4x1xf32> to vector<1x4x1xf32>
    %23 = vector.broadcast %22 : vector<1x4x1xf32> to vector<1x4x256xf32>
    %24 = arith.mulf %23, %19 : vector<1x4x256xf32>
    %25 = arith.addf %13, %24 : vector<1x4x256xf32>
    %c0_20 = arith.constant 0 : index
    %c0_21 = arith.constant 0 : index
    %c112 = arith.constant 112 : index
    %26 = vector.load %arg6[%c0_20, %c0_21, %c112] : memref<1x4x512xf32, #tpu.memory_space<vmem>>, vector<1x4x256xf32>
    %c1 = arith.constant 1 : index
    %c0_22 = arith.constant 0 : index
    %c0_23 = arith.constant 0 : index
    %27 = vector.load %arg3[%c1, %c0_22, %c0_23] : memref<9x1x256xf32, #tpu.memory_space<vmem>>, vector<1x1x256xf32>
    %28 = vector.shape_cast %27 : vector<1x1x256xf32> to vector<1x256xf32>
    %29 = vector.shape_cast %28 : vector<1x256xf32> to vector<1x1x256xf32>
    %30 = vector.broadcast %29 : vector<1x1x256xf32> to vector<1x4x256xf32>
    %31 = arith.mulf %26, %30 : vector<1x4x256xf32>
    %c1_24 = arith.constant 1 : index
    %c0_25 = arith.constant 0 : index
    %c0_26 = arith.constant 0 : index
    %32 = vector.load %arg2[%c1_24, %c0_25, %c0_26] : memref<9x4x1xf32, #tpu.memory_space<vmem>>, vector<1x4x1xf32>
    %33 = vector.shape_cast %32 : vector<1x4x1xf32> to vector<4x1xf32>
    %34 = vector.shape_cast %33 : vector<4x1xf32> to vector<1x4x1xf32>
    %35 = vector.broadcast %34 : vector<1x4x1xf32> to vector<1x4x256xf32>
    %36 = arith.mulf %35, %31 : vector<1x4x256xf32>
    %37 = arith.addf %25, %36 : vector<1x4x256xf32>
    %c0_27 = arith.constant 0 : index
    %c0_28 = arith.constant 0 : index
    %c113 = arith.constant 113 : index
    %38 = vector.load %arg6[%c0_27, %c0_28, %c113] : memref<1x4x512xf32, #tpu.memory_space<vmem>>, vector<1x4x256xf32>
    %c2 = arith.constant 2 : index
    %c0_29 = arith.constant 0 : index
    %c0_30 = arith.constant 0 : index
    %39 = vector.load %arg3[%c2, %c0_29, %c0_30] : memref<9x1x256xf32, #tpu.memory_space<vmem>>, vector<1x1x256xf32>
    %40 = vector.shape_cast %39 : vector<1x1x256xf32> to vector<1x256xf32>
    %41 = vector.shape_cast %40 : vector<1x256xf32> to vector<1x1x256xf32>
    %42 = vector.broadcast %41 : vector<1x1x256xf32> to vector<1x4x256xf32>
    %43 = arith.mulf %38, %42 : vector<1x4x256xf32>
    %c2_31 = arith.constant 2 : index
    %c0_32 = arith.constant 0 : index
    %c0_33 = arith.constant 0 : index
    %44 = vector.load %arg2[%c2_31, %c0_32, %c0_33] : memref<9x4x1xf32, #tpu.memory_space<vmem>>, vector<1x4x1xf32>
    %45 = vector.shape_cast %44 : vector<1x4x1xf32> to vector<4x1xf32>
    %46 = vector.shape_cast %45 : vector<4x1xf32> to vector<1x4x1xf32>
    %47 = vector.broadcast %46 : vector<1x4x1xf32> to vector<1x4x256xf32>
    %48 = arith.mulf %47, %43 : vector<1x4x256xf32>
    %49 = arith.addf %37, %48 : vector<1x4x256xf32>
    %c0_34 = arith.constant 0 : index
    %c0_35 = arith.constant 0 : index
    %c127 = arith.constant 127 : index
    %50 = vector.load %arg6[%c0_34, %c0_35, %c127] : memref<1x4x512xf32, #tpu.memory_space<vmem>>, vector<1x4x256xf32>
    %c3 = arith.constant 3 : index
    %c0_36 = arith.constant 0 : index
    %c0_37 = arith.constant 0 : index
    %51 = vector.load %arg3[%c3, %c0_36, %c0_37] : memref<9x1x256xf32, #tpu.memory_space<vmem>>, vector<1x1x256xf32>
    %52 = vector.shape_cast %51 : vector<1x1x256xf32> to vector<1x256xf32>
    %53 = vector.shape_cast %52 : vector<1x256xf32> to vector<1x1x256xf32>
    %54 = vector.broadcast %53 : vector<1x1x256xf32> to vector<1x4x256xf32>
    %55 = arith.mulf %50, %54 : vector<1x4x256xf32>
    %c3_38 = arith.constant 3 : index
    %c0_39 = arith.constant 0 : index
    %c0_40 = arith.constant 0 : index
    %56 = vector.load %arg2[%c3_38, %c0_39, %c0_40] : memref<9x4x1xf32, #tpu.memory_space<vmem>>, vector<1x4x1xf32>
    %57 = vector.shape_cast %56 : vector<1x4x1xf32> to vector<4x1xf32>
    %58 = vector.shape_cast %57 : vector<4x1xf32> to vector<1x4x1xf32>
    %59 = vector.broadcast %58 : vector<1x4x1xf32> to vector<1x4x256xf32>
    %60 = arith.mulf %59, %55 : vector<1x4x256xf32>
    %61 = arith.addf %49, %60 : vector<1x4x256xf32>
    %c4 = arith.constant 4 : index
    %c0_41 = arith.constant 0 : index
    %c0_42 = arith.constant 0 : index
    %62 = vector.load %arg2[%c4, %c0_41, %c0_42] : memref<9x4x1xf32, #tpu.memory_space<vmem>>, vector<1x4x1xf32>
    %63 = vector.shape_cast %62 : vector<1x4x1xf32> to vector<4x1xf32>
    %64 = vector.shape_cast %63 : vector<4x1xf32> to vector<1x4x1xf32>
    %65 = vector.broadcast %64 : vector<1x4x1xf32> to vector<1x4x256xf32>
    %66 = arith.mulf %65, %9 : vector<1x4x256xf32>
    %67 = arith.addf %61, %66 : vector<1x4x256xf32>
    %c0_43 = arith.constant 0 : index
    %c0_44 = arith.constant 0 : index
    %c129 = arith.constant 129 : index
    %68 = vector.load %arg6[%c0_43, %c0_44, %c129] : memref<1x4x512xf32, #tpu.memory_space<vmem>>, vector<1x4x256xf32>
    %c5 = arith.constant 5 : index
    %c0_45 = arith.constant 0 : index
    %c0_46 = arith.constant 0 : index
    %69 = vector.load %arg3[%c5, %c0_45, %c0_46] : memref<9x1x256xf32, #tpu.memory_space<vmem>>, vector<1x1x256xf32>
    %70 = vector.shape_cast %69 : vector<1x1x256xf32> to vector<1x256xf32>
    %71 = vector.shape_cast %70 : vector<1x256xf32> to vector<1x1x256xf32>
    %72 = vector.broadcast %71 : vector<1x1x256xf32> to vector<1x4x256xf32>
    %73 = arith.mulf %68, %72 : vector<1x4x256xf32>
    %c5_47 = arith.constant 5 : index
    %c0_48 = arith.constant 0 : index
    %c0_49 = arith.constant 0 : index
    %74 = vector.load %arg2[%c5_47, %c0_48, %c0_49] : memref<9x4x1xf32, #tpu.memory_space<vmem>>, vector<1x4x1xf32>
    %75 = vector.shape_cast %74 : vector<1x4x1xf32> to vector<4x1xf32>
    %76 = vector.shape_cast %75 : vector<4x1xf32> to vector<1x4x1xf32>
    %77 = vector.broadcast %76 : vector<1x4x1xf32> to vector<1x4x256xf32>
    %78 = arith.mulf %77, %73 : vector<1x4x256xf32>
    %79 = arith.addf %67, %78 : vector<1x4x256xf32>
    %c0_50 = arith.constant 0 : index
    %c0_51 = arith.constant 0 : index
    %c143 = arith.constant 143 : index
    %80 = vector.load %arg6[%c0_50, %c0_51, %c143] : memref<1x4x512xf32, #tpu.memory_space<vmem>>, vector<1x4x256xf32>
    %c6 = arith.constant 6 : index
    %c0_52 = arith.constant 0 : index
    %c0_53 = arith.constant 0 : index
    %81 = vector.load %arg3[%c6, %c0_52, %c0_53] : memref<9x1x256xf32, #tpu.memory_space<vmem>>, vector<1x1x256xf32>
    %82 = vector.shape_cast %81 : vector<1x1x256xf32> to vector<1x256xf32>
    %83 = vector.shape_cast %82 : vector<1x256xf32> to vector<1x1x256xf32>
    %84 = vector.broadcast %83 : vector<1x1x256xf32> to vector<1x4x256xf32>
    %85 = arith.mulf %80, %84 : vector<1x4x256xf32>
    %c6_54 = arith.constant 6 : index
    %c0_55 = arith.constant 0 : index
    %c0_56 = arith.constant 0 : index
    %86 = vector.load %arg2[%c6_54, %c0_55, %c0_56] : memref<9x4x1xf32, #tpu.memory_space<vmem>>, vector<1x4x1xf32>
    %87 = vector.shape_cast %86 : vector<1x4x1xf32> to vector<4x1xf32>
    %88 = vector.shape_cast %87 : vector<4x1xf32> to vector<1x4x1xf32>
    %89 = vector.broadcast %88 : vector<1x4x1xf32> to vector<1x4x256xf32>
    %90 = arith.mulf %89, %85 : vector<1x4x256xf32>
    %91 = arith.addf %79, %90 : vector<1x4x256xf32>
    %c0_57 = arith.constant 0 : index
    %c0_58 = arith.constant 0 : index
    %c144 = arith.constant 144 : index
    %92 = vector.load %arg6[%c0_57, %c0_58, %c144] : memref<1x4x512xf32, #tpu.memory_space<vmem>>, vector<1x4x256xf32>
    %c7 = arith.constant 7 : index
    %c0_59 = arith.constant 0 : index
    %c0_60 = arith.constant 0 : index
    %93 = vector.load %arg3[%c7, %c0_59, %c0_60] : memref<9x1x256xf32, #tpu.memory_space<vmem>>, vector<1x1x256xf32>
    %94 = vector.shape_cast %93 : vector<1x1x256xf32> to vector<1x256xf32>
    %95 = vector.shape_cast %94 : vector<1x256xf32> to vector<1x1x256xf32>
    %96 = vector.broadcast %95 : vector<1x1x256xf32> to vector<1x4x256xf32>
    %97 = arith.mulf %92, %96 : vector<1x4x256xf32>
    %c7_61 = arith.constant 7 : index
    %c0_62 = arith.constant 0 : index
    %c0_63 = arith.constant 0 : index
    %98 = vector.load %arg2[%c7_61, %c0_62, %c0_63] : memref<9x4x1xf32, #tpu.memory_space<vmem>>, vector<1x4x1xf32>
    %99 = vector.shape_cast %98 : vector<1x4x1xf32> to vector<4x1xf32>
    %100 = vector.shape_cast %99 : vector<4x1xf32> to vector<1x4x1xf32>
    %101 = vector.broadcast %100 : vector<1x4x1xf32> to vector<1x4x256xf32>
    %102 = arith.mulf %101, %97 : vector<1x4x256xf32>
    %103 = arith.addf %91, %102 : vector<1x4x256xf32>
    %c0_64 = arith.constant 0 : index
    %c0_65 = arith.constant 0 : index
    %c145 = arith.constant 145 : index
    %104 = vector.load %arg6[%c0_64, %c0_65, %c145] : memref<1x4x512xf32, #tpu.memory_space<vmem>>, vector<1x4x256xf32>
    %c8 = arith.constant 8 : index
    %c0_66 = arith.constant 0 : index
    %c0_67 = arith.constant 0 : index
    %105 = vector.load %arg3[%c8, %c0_66, %c0_67] : memref<9x1x256xf32, #tpu.memory_space<vmem>>, vector<1x1x256xf32>
    %106 = vector.shape_cast %105 : vector<1x1x256xf32> to vector<1x256xf32>
    %107 = vector.shape_cast %106 : vector<1x256xf32> to vector<1x1x256xf32>
    %108 = vector.broadcast %107 : vector<1x1x256xf32> to vector<1x4x256xf32>
    %109 = arith.mulf %104, %108 : vector<1x4x256xf32>
    %c8_68 = arith.constant 8 : index
    %c0_69 = arith.constant 0 : index
    %c0_70 = arith.constant 0 : index
    %110 = vector.load %arg2[%c8_68, %c0_69, %c0_70] : memref<9x4x1xf32, #tpu.memory_space<vmem>>, vector<1x4x1xf32>
    %111 = vector.shape_cast %110 : vector<1x4x1xf32> to vector<4x1xf32>
    %112 = vector.shape_cast %111 : vector<4x1xf32> to vector<1x4x1xf32>
    %113 = vector.broadcast %112 : vector<1x4x1xf32> to vector<1x4x256xf32>
    %114 = arith.mulf %113, %109 : vector<1x4x256xf32>
    %115 = arith.addf %103, %114 : vector<1x4x256xf32>
    %cst_71 = arith.constant 0.000000e+00 : f32
    %116 = vector.broadcast %cst_71 : f32 to vector<1x4x256xf32>
    %117 = arith.maximumf %115, %116 : vector<1x4x256xf32>
    %cst_72 = arith.constant 0.0156862754 : f32
    %118 = vector.broadcast %cst_72 : f32 to vector<1x4x256xf32>
    %119 = arith.divf %117, %118 : vector<1x4x256xf32>
    %120 = math.roundeven %119 : vector<1x4x256xf32>
    %cst_73 = arith.constant 0.000000e+00 : f32
    %cst_74 = arith.constant 2.550000e+02 : f32
    %121 = vector.broadcast %cst_73 : f32 to vector<1x4x256xf32>
    %122 = arith.maximumf %121, %120 : vector<1x4x256xf32>
    %123 = vector.broadcast %cst_74 : f32 to vector<1x4x256xf32>
    %124 = arith.minimumf %123, %122 : vector<1x4x256xf32>
    %cst_75 = arith.constant 0.0156862754 : f32
    %125 = vector.broadcast %cst_75 : f32 to vector<1x4x256xf32>
    %126 = arith.mulf %124, %125 : vector<1x4x256xf32>
    %c0_76 = arith.constant 0 : index
    %c0_77 = arith.constant 0 : index
    %c0_78 = arith.constant 0 : index
    %127 = vector.load %arg7[%c0_76, %c0_77, %c0_78] : memref<1x8x256xf32, #tpu.memory_space<vmem>>, vector<1x4x256xf32>
    tpu.vector_store %arg7[%c0_76, %c0_77, %c0_78], %126 {strides = array<i32>} : memref<1x8x256xf32, #tpu.memory_space<vmem>>, vector<1x4x256xf32>,
    %c0_79 = arith.constant 0 : index
    %c4_80 = arith.constant 4 : index
    %c0_81 = arith.constant 0 : index
    %128 = vector.load %arg7[%c0_79, %c4_80, %c0_81] : memref<1x8x256xf32, #tpu.memory_space<vmem>>, vector<1x4x256xf32>
    tpu.vector_store %arg7[%c0_79, %c4_80, %c0_81], %9 {strides = array<i32>} : memref<1x8x256xf32, #tpu.memory_space<vmem>>, vector<1x4x256xf32>,
    %c0_82 = arith.constant 0 : index
    %c0_83 = arith.constant 0 : index
    %129 = vector.load %arg4[%c0_82, %c0_83] : memref<8x8xf32, #tpu.memory_space<vmem>>, vector<8x8xf32>
    %c0_84 = arith.constant 0 : index
    %c0_85 = arith.constant 0 : index
    %c0_86 = arith.constant 0 : index
    %130 = vector.load %arg7[%c0_84, %c0_85, %c0_86] : memref<1x8x256xf32, #tpu.memory_space<vmem>>, vector<1x8x256xf32>
    %131 = vector.shape_cast %130 : vector<1x8x256xf32> to vector<8x256xf32>
    %cst_87 = arith.constant dense<0.000000e+00> : vector<8x256xf32>
    %132 = tpu.matmul %129, %131, %cst_87 {dimension_numbers = #tpu.dot_dimension_numbers<[1], [0], [0], [1], [0, 0, 1, 1], [], []>} : vector<8x8xf32>, vector<8x256xf32>, vector<8x256xf32> -> vector<8x256xf32>
    %cst_88 = arith.constant 0.0314960629 : f32
    %133 = vector.broadcast %cst_88 : f32 to vector<8x256xf32>
    %134 = arith.divf %132, %133 : vector<8x256xf32>
    %135 = math.roundeven %134 : vector<8x256xf32>
    %cst_89 = arith.constant -1.280000e+02 : f32
    %cst_90 = arith.constant 1.270000e+02 : f32
    %136 = vector.broadcast %cst_89 : f32 to vector<8x256xf32>
    %137 = arith.maximumf %136, %135 : vector<8x256xf32>
    %138 = vector.broadcast %cst_90 : f32 to vector<8x256xf32>
    %139 = arith.minimumf %138, %137 : vector<8x256xf32>
    %cst_91 = arith.constant 0.0314960629 : f32
    %140 = vector.broadcast %cst_91 : f32 to vector<8x256xf32>
    %141 = arith.mulf %139, %140 : vector<8x256xf32>
    %c0_92 = arith.constant 0 : index
    %c0_93 = arith.constant 0 : index
    %c0_94 = arith.constant 0 : index
    %142 = vector.load %arg5[%c0_92, %c0_93, %c0_94] : memref<1x8x256xf32, #tpu.memory_space<vmem>>, vector<1x8x256xf32>
    %143 = vector.shape_cast %142 : vector<1x8x256xf32> to vector<8x256xf32>
    %144 = vector.shape_cast %141 : vector<8x256xf32> to vector<1x8x256xf32>
    tpu.vector_store %arg5[%c0_92, %c0_93, %c0_94], %144 {strides = array<i32>} : memref<1x8x256xf32, #tpu.memory_space<vmem>>, vector<1x8x256xf32>,
    return
  }
  func.func @transform_0(%arg0: i32) -> (i32, i32, i32) {
    %c0_i32 = arith.constant 0 : i32
    %c0_i32_0 = arith.constant 0 : i32
    %c0_i32_1 = arith.constant 0 : i32
    return %arg0, %c0_i32, %c0_i32_0 : i32, i32, i32
  }
  func.func @transform_1(%arg0: i32) -> (i32, i32, i32) {
    %c0_i32 = arith.constant 0 : i32
    %c0_i32_0 = arith.constant 0 : i32
    %c0_i32_1 = arith.constant 0 : i32
    %c0_i32_2 = arith.constant 0 : i32
    return %c0_i32, %c0_i32_0, %c0_i32_1 : i32, i32, i32
  }
  func.func @transform_2(%arg0: i32) -> (i32, i32, i32) {
    %c0_i32 = arith.constant 0 : i32
    %c0_i32_0 = arith.constant 0 : i32
    %c0_i32_1 = arith.constant 0 : i32
    %c0_i32_2 = arith.constant 0 : i32
    return %c0_i32, %c0_i32_0, %c0_i32_1 : i32, i32, i32
  }
  func.func @transform_3(%arg0: i32) -> (i32, i32) {
    %c0_i32 = arith.constant 0 : i32
    %c0_i32_0 = arith.constant 0 : i32
    %c0_i32_1 = arith.constant 0 : i32
    return %c0_i32, %c0_i32_0 : i32, i32
  }
  func.func @transform_4(%arg0: i32) -> (i32, i32, i32) {
    %c0_i32 = arith.constant 0 : i32
    %c0_i32_0 = arith.constant 0 : i32
    %c0_i32_1 = arith.constant 0 : i32
    return %arg0, %c0_i32, %c0_i32_0 : i32, i32, i32
  }
}

</mosaic_0001>

<llo_original>
// kernel: quant_pdc_block.1
$region0: #{quant_pdc_block.1}
  #allocation0 [shape = 'u32[]', space=smem, size = 0x4, offset = 0x4, fixed_abs, tag = 'smem constant byte address 0x4 - core index']
  #allocation1 [shape = 'u32[72,128]{1,0:T(1,128)}', space=vmem, size = 0x9000, scoped, tag = 'internal scratch']
  #allocation2 [shape = 'f32[1,4,512]{2,1,0:T(4,128)}', space=vmem, size = 0x2000, scoped, tag = 'scratch operand']
  #allocation3 [shape = 'f32[1,8,256]{2,1,0:T(8,128)}', space=vmem, size = 0x2000, scoped, tag = 'scratch operand']
  %s0 = inlined_call_operand.vmem [shape: f32[2,4,256], index: 0, kind: input, shape index: {}]
  %s1 = inlined_call_operand.vmem [shape: f32[9,4,1], index: 1, kind: input, shape index: {}]
  %s2 = inlined_call_operand.vmem [shape: f32[9,1,256], index: 2, kind: input, shape index: {}]
  %s3 = inlined_call_operand.vmem [shape: f32[8,8], index: 3, kind: input, shape index: {}]
  %s4 = inlined_call_operand.vmem [shape: f32[2,8,256], index: 4, kind: output, shape index: {}]
  %s5 = sld [smem:[#allocation0]]
  $region49: #{quant_pdc_block.1} parent=0
    _
  %s7 = ssub.s32 1, %s5
  %s8 = scalar_select 0, %s7, %s5
  loop: start=0, step=1, limit=4
  $region2: #{quant_pdc_block.1} parent=0 // loop_pre_header
    _
  $region3: #{quant_pdc_block.1} parent=0 // loop_header
    %s10 = sphi 0, %s14
    %p11 = scmp.ge.s32.totalorder %s10, 4
    %s20 = sphi 0, %s22
    %s23 = sphi 0, %s20
    %s24 = sphi 0, %s23
    %s40 = sphi 0, %s24
    %s44 = sphi 0, %s44
    %s46 = sphi 0, %s44
    %s47 = sphi 0, %s46
    %s61 = sphi 0, %s47
    %s65 = sphi 0, %s65
    %s67 = sphi 0, %s65
    %s68 = sphi 0, %s67
    %s82 = sphi 0, %s68
    %s86 = sphi 0, %s86
    %s88 = sphi 0, %s86
    %s89 = sphi 0, %s88
    %s103 = sphi 0, %s89
    %s109 = sphi 0, %s111
    %s112 = sphi 0, %s109
    %s113 = sphi 0, %s112
    %s129 = sphi 0, %s113
  $region4: #{quant_pdc_block.1} parent=0 // loop_header_branch
    %13 = sbr.rel (%p11) target = $region8
  $region5: #{quant_pdc_block.1} parent=0 // loop_body
    %s15 = ssub.s32 %s10, 1
    %s16 = ssub.s32 %s10, 2
    %s17 = sadd.s32 %s10, 1
    %s18 = ssub.s32 %s10, %s17
    %p19 = scmp.eq.s32.totalorder %s18, 0
    %s21 = sadd.s32 %s20, 1
    %s22 = scalar_select %p19, %s20, %s21
    %p25 = pneg %p19
    %p26 = scmp.eq.s32.totalorder %s10, 1
    %p27 = por %p25, %p26
    %p28 = scmp.ne.s32.totalorder %s20, %s23
    %p29 = scmp.eq.s32.totalorder %s10, 0
    %p30 = por %p28, %p29
    %p31 = scmp.ne.s32.totalorder %s20, %s23
    %p32 = scmp.eq.s32.totalorder %s15, 1
    %p33 = por %p31, %p32
    %p34 = scmp.ne.s32.totalorder %s23, %s24
    %p35 = scmp.eq.s32.totalorder %s15, 0
    %p36 = por %p34, %p35
    %p37 = scmp.ne.s32.totalorder %s23, %s24
    %p38 = scmp.eq.s32.totalorder %s16, 1
    %p39 = por %p37, %p38
    %p41 = scmp.ne.s32.totalorder %s24, %s40
    %p42 = scmp.eq.s32.totalorder %s16, 0
    %p43 = por %p41, %p42
    %s45 = sadd.s32 %s44, 1
    %p48 = scmp.eq.s32.totalorder %s10, 1
    %p49 = scmp.ne.s32.totalorder %s44, %s46
    %p50 = scmp.eq.s32.totalorder %s10, 0
    %p51 = por %p49, %p50
    %p52 = scmp.ne.s32.totalorder %s44, %s46
    %p53 = scmp.eq.s32.totalorder %s15, 1
    %p54 = por %p52, %p53
    %p55 = scmp.ne.s32.totalorder %s46, %s47
    %p56 = scmp.eq.s32.totalorder %s15, 0
    %p57 = por %p55, %p56
    %p58 = scmp.ne.s32.totalorder %s46, %s47
    %p59 = scmp.eq.s32.totalorder %s16, 1
    %p60 = por %p58, %p59
    %p62 = scmp.ne.s32.totalorder %s47, %s61
    %p63 = scmp.eq.s32.totalorder %s16, 0
    %p64 = por %p62, %p63
    %s66 = sadd.s32 %s65, 1
    %p69 = scmp.eq.s32.totalorder %s10, 1
    %p70 = scmp.ne.s32.totalorder %s65, %s67
    %p71 = scmp.eq.s32.totalorder %s10, 0
    %p72 = por %p70, %p71
    %p73 = scmp.ne.s32.totalorder %s65, %s67
    %p74 = scmp.eq.s32.totalorder %s15, 1
    %p75 = por %p73, %p74
    %p76 = scmp.ne.s32.totalorder %s67, %s68
    %p77 = scmp.eq.s32.totalorder %s15, 0
    %p78 = por %p76, %p77
    %p79 = scmp.ne.s32.totalorder %s67, %s68
    %p80 = scmp.eq.s32.totalorder %s16, 1
    %p81 = por %p79, %p80
    %p83 = scmp.ne.s32.totalorder %s68, %s82
    %p84 = scmp.eq.s32.totalorder %s16, 0
    %p85 = por %p83, %p84
    %s87 = sadd.s32 %s86, 1
    %p90 = scmp.eq.s32.totalorder %s10, 1
    %p91 = scmp.ne.s32.totalorder %s86, %s88
    %p92 = scmp.eq.s32.totalorder %s10, 0
    %p93 = por %p91, %p92
    %p94 = scmp.ne.s32.totalorder %s86, %s88
    %p95 = scmp.eq.s32.totalorder %s15, 1
    %p96 = por %p94, %p95
    %p97 = scmp.ne.s32.totalorder %s88, %s89
    %p98 = scmp.eq.s32.totalorder %s15, 0
    %p99 = por %p97, %p98
    %p100 = scmp.ne.s32.totalorder %s88, %s89
    %p101 = scmp.eq.s32.totalorder %s16, 1
    %p102 = por %p100, %p101
    %p104 = scmp.ne.s32.totalorder %s89, %s103
    %p105 = scmp.eq.s32.totalorder %s16, 0
    %p106 = por %p104, %p105
    %s107 = ssub.s32 %s10, %s17
    %p108 = scmp.eq.s32.totalorder %s107, 0
    %s110 = sadd.s32 %s109, 1
    %s111 = scalar_select %p108, %s109, %s110
    %p114 = pneg %p108
    %p115 = scmp.eq.s32.totalorder %s10, 1
    %p116 = por %p114, %p115
    %p117 = scmp.ne.s32.totalorder %s109, %s112
    %p118 = scmp.eq.s32.totalorder %s10, 0
    %p119 = por %p117, %p118
    %p120 = scmp.ne.s32.totalorder %s109, %s112
    %p121 = scmp.eq.s32.totalorder %s15, 1
    %p122 = por %p120, %p121
    %p123 = scmp.ne.s32.totalorder %s112, %s113
    %p124 = scmp.eq.s32.totalorder %s15, 0
    %p125 = por %p123, %p124
    %p126 = scmp.ne.s32.totalorder %s112, %s113
    %p127 = scmp.eq.s32.totalorder %s16, 1
    %p128 = por %p126, %p127
    %p130 = scmp.ne.s32.totalorder %s113, %s129
    %p131 = scmp.eq.s32.totalorder %s16, 0
    %p132 = por %p130, %p131
    %p133 = scmp.le.s32.totalorder 1, %s10
    %p134 = scmp.lt.s32.totalorder %s10, 3
    %p135 = pnand %p133, %p134
    %p136 = pneg %p135
    // Predicated region
    $region9: #{quant_pdc_block.1} parent=5 // pred_check
      _
    $region10: #{quant_pdc_block.1} parent=5 // pred_check_branch
      %138 = sbr.rel (%p135) target = $region12
    $region11: #{quant_pdc_block.1} parent=5 // pred_region
      %s139 = ssub.s32 %s10, 1
      // Predicated region
      $region13: #{quant_pdc_block.1} parent=11 // pred_check
        %p140 = pneg %p57
      $region14: #{quant_pdc_block.1} parent=11 // pred_check_branch
        %142 = sbr.rel (%p140) target = $region16
      $region15: #{quant_pdc_block.1} parent=11 // pred_region
        _
      $region16: #{quant_pdc_block.1} parent=11 // pred_fallthru
        _
      // Predicated region
      $region17: #{quant_pdc_block.1} parent=11 // pred_check
        %p143 = pneg %p78
      $region18: #{quant_pdc_block.1} parent=11 // pred_check_branch
        %145 = sbr.rel (%p143) target = $region20
      $region19: #{quant_pdc_block.1} parent=11 // pred_region
        _
      $region20: #{quant_pdc_block.1} parent=11 // pred_fallthru
        _
      // Predicated region
      $region21: #{quant_pdc_block.1} parent=11 // pred_check
        %p146 = pneg %p99
      $region22: #{quant_pdc_block.1} parent=11 // pred_check_branch
        %148 = sbr.rel (%p146) target = $region24
      $region23: #{quant_pdc_block.1} parent=11 // pred_region
        _
      $region24: #{quant_pdc_block.1} parent=11 // pred_fallthru
        _
    $region12: #{quant_pdc_block.1} parent=5 // pred_fallthru
      _
    %p149 = scmp.lt.s32.totalorder %s10, 2
    // Predicated region
    $region25: #{quant_pdc_block.1} parent=5 // pred_check
      %p150 = pneg %p149
    $region26: #{quant_pdc_block.1} parent=5 // pred_check_branch
      %152 = sbr.rel (%p150) target = $region28
    $region27: #{quant_pdc_block.1} parent=5 // pred_region
      // Predicated region
      $region29: #{quant_pdc_block.1} parent=27 // pred_check
        %p153 = pneg %p30
      $region30: #{quant_pdc_block.1} parent=27 // pred_check_branch
        %155 = sbr.rel (%p153) target = $region32
      $region31: #{quant_pdc_block.1} parent=27 // pred_region
        %p156 = scmp.lt.s32.totalorder %s10, 1
        %s157 = scalar_select %p156, %s10, 1
        %s158 = smul.addr %s157, 2
        %s159 = smul.addr %s158, 4
        %s160 = scalar_lea.vmem %s0, %s159
      $region32: #{quant_pdc_block.1} parent=27 // pred_fallthru
        _
    $region28: #{quant_pdc_block.1} parent=5 // pred_fallthru
      _
    %p161 = scmp.le.s32.totalorder 1, %s10
    %p162 = scmp.lt.s32.totalorder %s10, 3
    %p163 = pnand %p161, %p162
    %p164 = pneg %p163
    // Predicated region
    $region33: #{quant_pdc_block.1} parent=5 // pred_check
      _
    $region34: #{quant_pdc_block.1} parent=5 // pred_check_branch
      %166 = sbr.rel (%p163) target = $region36
    $region35: #{quant_pdc_block.1} parent=5 // pred_region
      %s167 = ssub.s32 %s10, 1
      %p168 = scmp.lt.s32.totalorder %s15, 1
      %s169 = scalar_select %p168, %s15, 1
      %s170 = smul.addr %s169, 2
      %s171 = smul.addr %s170, 4
      %s172 = scalar_lea.vmem %s0, %s171
      %p173 = pneg %p36
      %p174 = pneg %p33
      %p175 = pneg %p57
      %p176 = pneg %p54
      %p177 = pneg %p78
      %p178 = pneg %p75
      %p179 = pneg %p99
      %p180 = pneg %p96
      %p181 = pneg %p125
      %p182 = pneg %p122
      %p183 = scmp.lt.s32.totalorder %s15, 1
      %s184 = scalar_select %p183, %s15, 1
      %s185 = smul.addr %s184, 2
      %s186 = smul.addr %s185, 8
      %s187 = scalar_lea.vmem %s4, %s186
      %p188 = scmp.lt.s32.totalorder %s15, 1
      %s189 = scalar_select %p188, %s15, 1
      %s190 = smul.addr %s189, 2
      %s191 = smul.addr %s190, 4
      %s192 = scalar_lea.vmem %s0, %s191
      %p193 = scmp.lt.s32.totalorder %s15, 1
      %s194 = scalar_select %p193, %s15, 1
      %s195 = smul.addr %s194, 2
      %s196 = smul.addr %s195, 8
      %s197 = scalar_lea.vmem %s4, %s196
      %v198 = vld [vmem:[%s192] sm:$0xff]
      %v199 = vrcp.pop 0.031496063
      %v200 = vmul.f32 0.031496063, %v199
      %v201 = vsub.f32 1.0, %v200
      %v202 = vmul.f32 %v199, %v201
      %v203 = vadd.f32 %v199, %v202
      %vm204 = vweird.f32 %v199
      %v205 = vsel %vm204, %v199, %v203
      %v206 = vmul.f32 %v198, %v205
      %v207 = vround.ne.pseudo %v206
      %v208 = vmax.f32 %v207, -128.0
      %v209 = vmin.f32 %v208, 127.0
      %v210 = vmul.f32 %v209, 0.031496063
      %211 = vst [vmem:[#allocation2] sm:$0xff] 0.0
      %212 = vst [vmem:[#allocation2 + $0x8] sm:$0xff] 0.0
      %213 = vst [vmem:[#allocation2 + $0x4] sm:$0xff] %v210
      %v214 = vld [vmem:[#allocation2] sm:$0xff]
      %v215 = vld [vmem:[#allocation2 + $0x8] sm:$0xf]
      %v216 = vld [vmem:[%s2] sm:$0x3]
      %v218 = vperm.slane %v216, 0
      %v219 = vperm.slane %v216, 1
      %v220 = vrot.slane %v219, 4
      %vm221 = vcmask 1043456
      %v222 = vsel %vm221, %v218, %v220
      %223 = vrot.lane.b32.xlu0 %v222, 111
      %v224 = vpop.permute.xlu0 %223
      %v225 = vrot.slane %v224, 4
      %vm226 = vcmask 908288
      %v227 = vsel %vm226, %v225, %v224
      %v230 = vmul.f32 %v214, %v227
      %v231 = vmul.f32 %v215, %v225
      %v232 = vld [vmem:[%s1] sm:$0xf]
      %234 = vset.pattern.permute.xlu0 0
      %235 = vperm.xlu0 %234, %v232
      %v236 = vpop.permute.xlu0 %235
      %240 = vst [vmem:[#allocation1] ss:$2 sm:$0xff] %v230
      %s241 = scalar_lea.vmem [#allocation1], 16
      %242 = vst [vmem:[%s241] ss:$2 sm:$0xff] %v231
      %v243 = vld.sshfl [vmem:[#allocation1] sm:$0xff pattern:$0x75316420]
      %v244 = vld.sshfl [vmem:[#allocation1 + $0x8] sm:$0xff pattern:$0x75316420]
      %v245 = vld.sshfl [vmem:[#allocation1 + $0x10] sm:$0xff pattern:$0x75316420]
      %246 = vrot.lane.b32.xlu0 %v243, 17
      %v247 = vpop.permute.xlu0 %246
      %248 = vrot.lane.b32.xlu0 %v244, 17
      %v249 = vpop.permute.xlu0 %248
      %250 = vrot.lane.b32.xlu0 %v245, 17
      %v251 = vpop.permute.xlu0 %250
      %vm252 = vcmask 138240
      %v253 = vsel %vm252, %v247, %v249
      %v254 = vsel %vm252, %v249, %v251
      %v257 = vmul.f32 %v236, %v253
      %v258 = vmul.f32 %v236, %v254
      %v259 = vadd.f32 %v257, 0.0
      %v260 = vadd.f32 %v258, 0.0
      %v261 = vld [vmem:[#allocation2] sm:$0xff]
      %v262 = vld [vmem:[#allocation2 + $0x8] sm:$0xf]
      %s263 = scalar_lea.vmem %s2, 2
      %v264 = vld [vmem:[%s263] sm:$0x3]
      %v266 = vperm.slane %v264, 0
      %v267 = vperm.slane %v264, 1
      %v268 = vrot.slane %v267, 4
      %v269 = vsel %vm221, %v266, %v268
      %270 = vrot.lane.b32.xlu0 %v269, 112
      %v271 = vpop.permute.xlu0 %270
      %v272 = vrot.slane %v271, 4
      %vm273 = vcmask 916480
      %v274 = vsel %vm273, %v272, %v271
      %v277 = vmul.f32 %v261, %v274
      %v278 = vmul.f32 %v262, %v272
      %s279 = scalar_lea.vmem %s1, 4
      %v280 = vld [vmem:[%s279] sm:$0xf]
      %282 = vset.pattern.permute.xlu0 0
      %283 = vperm.xlu0 %282, %v280
      %v284 = vpop.permute.xlu0 %283
      %288 = vst [vmem:[#allocation1] ss:$2 sm:$0xff] %v277
      %s289 = scalar_lea.vmem [#allocation1], 16
      %290 = vst [vmem:[%s289] ss:$2 sm:$0xff] %v278
      %v291 = vld.sshfl [vmem:[#allocation1] sm:$0xff pattern:$0x75316420]
      %v292 = vld.sshfl [vmem:[#allocation1 + $0x8] sm:$0xff pattern:$0x75316420]
      %v293 = vld.sshfl [vmem:[#allocation1 + $0x10] sm:$0xff pattern:$0x75316420]
      %294 = vrot.lane.b32.xlu0 %v291, 16
      %v295 = vpop.permute.xlu0 %294
      %296 = vrot.lane.b32.xlu0 %v292, 16
      %v297 = vpop.permute.xlu0 %296
      %298 = vrot.lane.b32.xlu0 %v293, 16
      %v299 = vpop.permute.xlu0 %298
      %vm300 = vcmask 130048
      %v301 = vsel %vm300, %v295, %v297
      %v302 = vsel %vm300, %v297, %v299
      %v305 = vmul.f32 %v284, %v301
      %v306 = vmul.f32 %v284, %v302
      %v307 = vadd.f32 %v259, %v305
      %v308 = vadd.f32 %v260, %v306
      %v309 = vld [vmem:[#allocation2] sm:$0xff]
      %v310 = vld [vmem:[#allocation2 + $0x8] sm:$0xf]
      %s311 = scalar_lea.vmem %s2, 4
      %v312 = vld [vmem:[%s311] sm:$0x3]
      %v314 = vperm.slane %v312, 0
      %v315 = vperm.slane %v312, 1
      %v316 = vrot.slane %v315, 4
      %v317 = vsel %vm221, %v314, %v316
      %318 = vrot.lane.b32.xlu0 %v317, 113
      %v319 = vpop.permute.xlu0 %318
      %v320 = vrot.slane %v319, 4
      %vm321 = vcmask 924672
      %v322 = vsel %vm321, %v320, %v319
      %v325 = vmul.f32 %v309, %v322
      %v326 = vmul.f32 %v310, %v320
      %s327 = scalar_lea.vmem %s1, 8
      %v328 = vld [vmem:[%s327] sm:$0xf]
      %330 = vset.pattern.permute.xlu0 0
      %331 = vperm.xlu0 %330, %v328
      %v332 = vpop.permute.xlu0 %331
      %336 = vst [vmem:[#allocation1] ss:$2 sm:$0xff] %v325
      %s337 = scalar_lea.vmem [#allocation1], 16
      %338 = vst [vmem:[%s337] ss:$2 sm:$0xff] %v326
      %v339 = vld.sshfl [vmem:[#allocation1] sm:$0xff pattern:$0x75316420]
      %v340 = vld.sshfl [vmem:[#allocation1 + $0x8] sm:$0xff pattern:$0x75316420]
      %v341 = vld.sshfl [vmem:[#allocation1 + $0x10] sm:$0xff pattern:$0x75316420]
      %342 = vrot.lane.b32.xlu0 %v339, 15
      %v343 = vpop.permute.xlu0 %342
      %344 = vrot.lane.b32.xlu0 %v340, 15
      %v345 = vpop.permute.xlu0 %344
      %346 = vrot.lane.b32.xlu0 %v341, 15
      %v347 = vpop.permute.xlu0 %346
      %vm348 = vcmask 121856
      %v349 = vsel %vm348, %v343, %v345
      %v350 = vsel %vm348, %v345, %v347
      %v353 = vmul.f32 %v332, %v349
      %v354 = vmul.f32 %v332, %v350
      %v355 = vadd.f32 %v307, %v353
      %v356 = vadd.f32 %v308, %v354
      %v357 = vld [vmem:[#allocation2] sm:$0xff]
      %v358 = vld [vmem:[#allocation2 + $0x8] sm:$0xf]
      %s359 = scalar_lea.vmem %s2, 6
      %v360 = vld [vmem:[%s359] sm:$0x3]
      %v362 = vperm.slane %v360, 0
      %v363 = vperm.slane %v360, 1
      %v364 = vrot.slane %v363, 4
      %v365 = vsel %vm221, %v362, %v364
      %366 = vrot.lane.b32.xlu0 %v365, 127
      %v367 = vpop.permute.xlu0 %366
      %v368 = vrot.slane %v367, 4
      %vm369 = vcmask 1039360
      %v370 = vsel %vm369, %v368, %v367
      %v373 = vmul.f32 %v357, %v370
      %v374 = vmul.f32 %v358, %v368
      %s375 = scalar_lea.vmem %s1, 12
      %v376 = vld [vmem:[%s375] sm:$0xf]
      %378 = vset.pattern.permute.xlu0 0
      %379 = vperm.xlu0 %378, %v376
      %v380 = vpop.permute.xlu0 %379
      %384 = vst [vmem:[#allocation1] ss:$2 sm:$0xff] %v373
      %s385 = scalar_lea.vmem [#allocation1], 16
      %386 = vst [vmem:[%s385] ss:$2 sm:$0xff] %v374
      %v387 = vld.sshfl [vmem:[#allocation1] sm:$0xff pattern:$0x75316420]
      %v388 = vld.sshfl [vmem:[#allocation1 + $0x8] sm:$0xff pattern:$0x75316420]
      %v389 = vld.sshfl [vmem:[#allocation1 + $0x10] sm:$0xff pattern:$0x75316420]
      %390 = vrot.lane.b32.xlu0 %v387, 1
      %v391 = vpop.permute.xlu0 %390
      %392 = vrot.lane.b32.xlu0 %v388, 1
      %v393 = vpop.permute.xlu0 %392
      %394 = vrot.lane.b32.xlu0 %v389, 1
      %v395 = vpop.permute.xlu0 %394
      %vm396 = vcmask 7168
      %v397 = vsel %vm396, %v391, %v393
      %v398 = vsel %vm396, %v393, %v395
      %v401 = vmul.f32 %v380, %v397
      %v402 = vmul.f32 %v380, %v398
      %v403 = vadd.f32 %v355, %v401
      %v404 = vadd.f32 %v356, %v402
      %s405 = scalar_lea.vmem %s1, 16
      %v406 = vld [vmem:[%s405] sm:$0xf]
      %408 = vset.pattern.permute.xlu0 0
      %409 = vperm.xlu0 %408, %v406
      %v410 = vpop.permute.xlu0 %409
      %413 = vst [vmem:[#allocation1] ss:$2 sm:$0xff] %v210
      %v414 = vld.sshfl [vmem:[#allocation1] sm:$0xff pattern:$0x75316420]
      %v415 = vld.sshfl [vmem:[#allocation1 + $0x8] sm:$0xff pattern:$0x75316420]
      %v418 = vmul.f32 %v410, %v414
      %v419 = vmul.f32 %v410, %v415
      %v420 = vadd.f32 %v403, %v418
      %v421 = vadd.f32 %v404, %v419
      %v422 = vld [vmem:[#allocation2 + $0x4] sm:$0xff]
      %v423 = vld [vmem:[#allocation2 + $0xc] sm:$0xf]
      %s424 = scalar_lea.vmem %s2, 10
      %v425 = vld [vmem:[%s424] sm:$0x3]
      %v427 = vperm.slane %v425, 0
      %v428 = vperm.slane %v425, 1
      %v429 = vrot.slane %v428, 4
      %v430 = vsel %vm221, %v427, %v429
      %431 = vrot.lane.b32.xlu0 %v430, 1
      %v432 = vpop.permute.xlu0 %431
      %v433 = vrot.slane %v432, 4
      %v434 = vsel %vm396, %v433, %v432
      %v437 = vmul.f32 %v422, %v434
      %v438 = vmul.f32 %v423, %v433
      %s439 = scalar_lea.vmem %s1, 20
      %v440 = vld [vmem:[%s439] sm:$0xf]
      %442 = vset.pattern.permute.xlu0 0
      %443 = vperm.xlu0 %442, %v440
      %v444 = vpop.permute.xlu0 %443
      %448 = vst [vmem:[#allocation1] ss:$2 sm:$0xff] %v437
      %s449 = scalar_lea.vmem [#allocation1], 16
      %450 = vst [vmem:[%s449] ss:$2 sm:$0xff] %v438
      %v451 = vld.sshfl [vmem:[#allocation1] sm:$0xff pattern:$0x75316420]
      %v452 = vld.sshfl [vmem:[#allocation1 + $0x8] sm:$0xff pattern:$0x75316420]
      %v453 = vld.sshfl [vmem:[#allocation1 + $0x10] sm:$0xff pattern:$0x75316420]
      %454 = vrot.lane.b32.xlu0 %v451, 127
      %v455 = vpop.permute.xlu0 %454
      %456 = vrot.lane.b32.xlu0 %v452, 127
      %v457 = vpop.permute.xlu0 %456
      %458 = vrot.lane.b32.xlu0 %v453, 127
      %v459 = vpop.permute.xlu0 %458
      %v460 = vsel %vm369, %v455, %v457
      %v461 = vsel %vm369, %v457, %v459
      %v464 = vmul.f32 %v444, %v460
      %v465 = vmul.f32 %v444, %v461
      %v466 = vadd.f32 %v420, %v464
      %v467 = vadd.f32 %v421, %v465
      %v468 = vld [vmem:[#allocation2 + $0x4] sm:$0xff]
      %v469 = vld [vmem:[#allocation2 + $0xc] sm:$0xf]
      %s470 = scalar_lea.vmem %s2, 12
      %v471 = vld [vmem:[%s470] sm:$0x3]
      %v473 = vperm.slane %v471, 0
      %v474 = vperm.slane %v471, 1
      %v475 = vrot.slane %v474, 4
      %v476 = vsel %vm221, %v473, %v475
      %477 = vrot.lane.b32.xlu0 %v476, 15
      %v478 = vpop.permute.xlu0 %477
      %v479 = vrot.slane %v478, 4
      %v480 = vsel %vm348, %v479, %v478
      %v483 = vmul.f32 %v468, %v480
      %v484 = vmul.f32 %v469, %v479
      %s485 = scalar_lea.vmem %s1, 24
      %v486 = vld [vmem:[%s485] sm:$0xf]
      %488 = vset.pattern.permute.xlu0 0
      %489 = vperm.xlu0 %488, %v486
      %v490 = vpop.permute.xlu0 %489
      %494 = vst [vmem:[#allocation1] ss:$2 sm:$0xff] %v483
      %s495 = scalar_lea.vmem [#allocation1], 16
      %496 = vst [vmem:[%s495] ss:$2 sm:$0xff] %v484
      %v497 = vld.sshfl [vmem:[#allocation1] sm:$0xff pattern:$0x75316420]
      %v498 = vld.sshfl [vmem:[#allocation1 + $0x8] sm:$0xff pattern:$0x75316420]
      %v499 = vld.sshfl [vmem:[#allocation1 + $0x10] sm:$0xff pattern:$0x75316420]
      %500 = vrot.lane.b32.xlu0 %v497, 113
      %v501 = vpop.permute.xlu0 %500
      %502 = vrot.lane.b32.xlu0 %v498, 113
      %v503 = vpop.permute.xlu0 %502
      %504 = vrot.lane.b32.xlu0 %v499, 113
      %v505 = vpop.permute.xlu0 %504
      %v506 = vsel %vm321, %v501, %v503
      %v507 = vsel %vm321, %v503, %v505
      %v510 = vmul.f32 %v490, %v506
      %v511 = vmul.f32 %v490, %v507
      %v512 = vadd.f32 %v466, %v510
      %v513 = vadd.f32 %v467, %v511
      %v514 = vld [vmem:[#allocation2 + $0x4] sm:$0xff]
      %v515 = vld [vmem:[#allocation2 + $0xc] sm:$0xf]
      %s516 = scalar_lea.vmem %s2, 14
      %v517 = vld [vmem:[%s516] sm:$0x3]
      %v519 = vperm.slane %v517, 0
      %v520 = vperm.slane %v517, 1
      %v521 = vrot.slane %v520, 4
      %v522 = vsel %vm221, %v519, %v521
      %523 = vrot.lane.b32.xlu0 %v522, 16
      %v524 = vpop.permute.xlu0 %523
      %v525 = vrot.slane %v524, 4
      %v526 = vsel %vm300, %v525, %v524
      %v529 = vmul.f32 %v514, %v526
      %v530 = vmul.f32 %v515, %v525
      %s531 = scalar_lea.vmem %s1, 28
      %v532 = vld [vmem:[%s531] sm:$0xf]
      %534 = vset.pattern.permute.xlu0 0
      %535 = vperm.xlu0 %534, %v532
      %v536 = vpop.permute.xlu0 %535
      %540 = vst [vmem:[#allocation1] ss:$2 sm:$0xff] %v529
      %s541 = scalar_lea.vmem [#allocation1], 16
      %542 = vst [vmem:[%s541] ss:$2 sm:$0xff] %v530
      %v543 = vld.sshfl [vmem:[#allocation1] sm:$0xff pattern:$0x75316420]
      %v544 = vld.sshfl [vmem:[#allocation1 + $0x8] sm:$0xff pattern:$0x75316420]
      %v545 = vld.sshfl [vmem:[#allocation1 + $0x10] sm:$0xff pattern:$0x75316420]
      %546 = vrot.lane.b32.xlu0 %v543, 112
      %v547 = vpop.permute.xlu0 %546
      %548 = vrot.lane.b32.xlu0 %v544, 112
      %v549 = vpop.permute.xlu0 %548
      %550 = vrot.lane.b32.xlu0 %v545, 112
      %v551 = vpop.permute.xlu0 %550
      %v552 = vsel %vm273, %v547, %v549
      %v553 = vsel %vm273, %v549, %v551
      %v556 = vmul.f32 %v536, %v552
      %v557 = vmul.f32 %v536, %v553
      %v558 = vadd.f32 %v512, %v556
      %v559 = vadd.f32 %v513, %v557
      %v560 = vld [vmem:[#allocation2 + $0x4] sm:$0xff]
      %v561 = vld [vmem:[#allocation2 + $0xc] sm:$0xf]
      %s562 = scalar_lea.vmem %s2, 16
      %v563 = vld [vmem:[%s562] sm:$0x3]
      %v565 = vperm.slane %v563, 0
      %v566 = vperm.slane %v563, 1
      %v567 = vrot.slane %v566, 4
      %v568 = vsel %vm221, %v565, %v567
      %569 = vrot.lane.b32.xlu0 %v568, 17
      %v570 = vpop.permute.xlu0 %569
      %v571 = vrot.slane %v570, 4
      %v572 = vsel %vm252, %v571, %v570
      %v575 = vmul.f32 %v560, %v572
      %v576 = vmul.f32 %v561, %v571
      %s577 = scalar_lea.vmem %s1, 32
      %v578 = vld [vmem:[%s577] sm:$0xf]
      %580 = vset.pattern.permute.xlu0 0
      %581 = vperm.xlu0 %580, %v578
      %v582 = vpop.permute.xlu0 %581
      %586 = vst [vmem:[#allocation1] ss:$2 sm:$0xff] %v575
      %s587 = scalar_lea.vmem [#allocation1], 16
      %588 = vst [vmem:[%s587] ss:$2 sm:$0xff] %v576
      %v589 = vld.sshfl [vmem:[#allocation1] sm:$0xff pattern:$0x75316420]
      %v590 = vld.sshfl [vmem:[#allocation1 + $0x8] sm:$0xff pattern:$0x75316420]
      %v591 = vld.sshfl [vmem:[#allocation1 + $0x10] sm:$0xff pattern:$0x75316420]
      %592 = vrot.lane.b32.xlu0 %v589, 111
      %v593 = vpop.permute.xlu0 %592
      %594 = vrot.lane.b32.xlu0 %v590, 111
      %v595 = vpop.permute.xlu0 %594
      %596 = vrot.lane.b32.xlu0 %v591, 111
      %v597 = vpop.permute.xlu0 %596
      %v598 = vsel %vm226, %v593, %v595
      %v599 = vsel %vm226, %v595, %v597
      %v602 = vmul.f32 %v582, %v598
      %v603 = vmul.f32 %v582, %v599
      %v604 = vadd.f32 %v558, %v602
      %v605 = vadd.f32 %v559, %v603
      %v606 = vmax.f32 %v604, 0.0
      %v607 = vmax.f32 %v605, 0.0
      %v608 = vrcp.pop 0.015686275
      %v609 = vmul.f32 0.015686275, %v608
      %v610 = vsub.f32 1.0, %v609
      %v611 = vmul.f32 %v608, %v610
      %v612 = vadd.f32 %v608, %v611
      %vm613 = vweird.f32 %v608
      %v614 = vsel %vm613, %v608, %v612
      %v615 = vmul.f32 %v606, %v614
      %v616 = vmul.f32 %v607, %v614
      %v617 = vround.ne.pseudo %v615
      %v618 = vround.ne.pseudo %v616
      %v619 = vmax.f32 %v617, 0.0
      %v620 = vmax.f32 %v618, 0.0
      %v621 = vmin.f32 %v619, 255.0
      %v622 = vmin.f32 %v620, 255.0
      %v623 = vmul.f32 %v621, 0.015686275
      %v624 = vmul.f32 %v622, 0.015686275
      %625 = vst [vmem:[#allocation3] sm:$0xf] %v623
      %626 = vst [vmem:[#allocation3 + $0x8] sm:$0xf] %v624
      %s627 = scalar_lea.vmem [#allocation1], 1
      %628 = vst [vmem:[%s627] ss:$2 sm:$0xff] %v210
      %v629 = vld.sshfl [vmem:[#allocation1] sm:$0xff pattern:$0x75316420]
      %v630 = vld.sshfl [vmem:[#allocation1 + $0x8] sm:$0xff pattern:$0x75316420]
      %633 = vst [vmem:[#allocation3] sm:$0xf0] %v629
      %634 = vst [vmem:[#allocation3 + $0x8] sm:$0xf0] %v630
      %v635 = vld [vmem:[%s3] sm:$0xff]
      %v636 = vld [vmem:[#allocation3] sm:$0xff]
      %v637 = vld [vmem:[#allocation3 + $0x8] sm:$0xff]
      %vm638 = vcmask 64512
      %v640 = vsel %vm638, %v635, 0
      %642 = vmatpush.msra.mxu0 0.0
      %643 = vmatpush.msra.mxu0 0.0
      %644 = vmatpush.msra.mxu0 0.0
      %645 = vmatpush.msra.mxu0 0.0
      %646 = vmatpush.msra.mxu0 0.0
      %647 = vmatpush.msra.mxu0 0.0
      %648 = vmatpush.msra.mxu0 0.0
      %649 = vmatpush.msra.mxu0 0.0
      %650 = vmatpush.msra.mxu0 0.0
      %651 = vmatpush.msra.mxu0 0.0
      %652 = vmatpush.msra.mxu0 0.0
      %653 = vmatpush.msra.mxu0 0.0
      %654 = vmatpush.msra.mxu0 0.0
      %655 = vmatpush.msra.mxu0 0.0
      %656 = vmatpush.msra.mxu0 0.0
      %657 = vmatpush.msra.mxu0 %v636
      %658 = vmatmul.f32.gmra.mxu0 %v640
      %v659 = vpop.f32.mrf.mxu0
      %v660 = vadd.f32 0.0, %v659
      %661 = vdwg.mxu0
      %662 = vmatpush.msra.mxu0 0.0
      %663 = vmatpush.msra.mxu0 0.0
      %664 = vmatpush.msra.mxu0 0.0
      %665 = vmatpush.msra.mxu0 0.0
      %666 = vmatpush.msra.mxu0 0.0
      %667 = vmatpush.msra.mxu0 0.0
      %668 = vmatpush.msra.mxu0 0.0
      %669 = vmatpush.msra.mxu0 0.0
      %670 = vmatpush.msra.mxu0 0.0
      %671 = vmatpush.msra.mxu0 0.0
      %672 = vmatpush.msra.mxu0 0.0
      %673 = vmatpush.msra.mxu0 0.0
      %674 = vmatpush.msra.mxu0 0.0
      %675 = vmatpush.msra.mxu0 0.0
      %676 = vmatpush.msra.mxu0 0.0
      %677 = vmatpush.msra.mxu0 %v637
      %678 = vmatmul.f32.gmra.mxu0 %v640
      %v679 = vpop.f32.mrf.mxu0
      %v680 = vadd.f32 0.0, %v679
      %681 = vdwg.mxu0
      %v682 = vmul.f32 %v660, %v205
      %v683 = vmul.f32 %v680, %v205
      %v684 = vround.ne.pseudo %v682
      %v685 = vround.ne.pseudo %v683
      %v686 = vmax.f32 %v684, -128.0
      %v687 = vmax.f32 %v685, -128.0
      %v688 = vmin.f32 %v686, 127.0
      %v689 = vmin.f32 %v687, 127.0
      %v690 = vmul.f32 %v688, 0.031496063
      %v691 = vmul.f32 %v689, 0.031496063
      %692 = vst [vmem:[%s197] sm:$0xff] %v690
      %693 = vst [vmem:[%s197 + $0x8] sm:$0xff] %v691
      %p694 = scmp.lt.s32.totalorder %s15, 1
      %s695 = scalar_select %p694, %s15, 1
      %s696 = smul.addr %s695, 2
      %s697 = smul.addr %s696, 8
      %s698 = scalar_lea.vmem %s4, %s697
      // Predicated region
      $region37: #{quant_pdc_block.1} parent=35 // pred_check
        %p699 = pneg %p122
      $region38: #{quant_pdc_block.1} parent=35 // pred_check_branch
        %701 = sbr.rel (%p699) target = $region40
      $region39: #{quant_pdc_block.1} parent=35 // pred_region
        _
      $region40: #{quant_pdc_block.1} parent=35 // pred_fallthru
        _
    $region36: #{quant_pdc_block.1} parent=5 // pred_fallthru
      _
    %p702 = scmp.le.s32.totalorder 2, %s10
    // Predicated region
    $region41: #{quant_pdc_block.1} parent=5 // pred_check
      %p703 = pneg %p702
    $region42: #{quant_pdc_block.1} parent=5 // pred_check_branch
      %705 = sbr.rel (%p703) target = $region44
    $region43: #{quant_pdc_block.1} parent=5 // pred_region
      %s706 = ssub.s32 %s10, 2
      // Predicated region
      $region45: #{quant_pdc_block.1} parent=43 // pred_check
        %p707 = pneg %p128
      $region46: #{quant_pdc_block.1} parent=43 // pred_check_branch
        %709 = sbr.rel (%p707) target = $region48
      $region47: #{quant_pdc_block.1} parent=43 // pred_region
        %p710 = scmp.lt.s32.totalorder %s16, 1
        %s711 = scalar_select %p710, %s16, 1
        %s712 = smul.addr %s711, 2
        %s713 = smul.addr %s712, 8
        %s714 = scalar_lea.vmem %s4, %s713
      $region48: #{quant_pdc_block.1} parent=43 // pred_fallthru
        _
    $region44: #{quant_pdc_block.1} parent=5 // pred_fallthru
      _
  $region6: #{quant_pdc_block.1} parent=0 // loop_footer
    %s14 = sadd.s32 1, %s10
  $region7: #{quant_pdc_block.1} parent=0 // loop_footer_branch
    %9 = sbr.rel target = $region3
  $region8: #{quant_pdc_block.1} parent=0 // loop_exit
    _

</llo_original>
